<compile_context>
chip_gen: v5e
topology: v5e:2x2
jax: 0.10.0
libtpu: 0.0.40
codegen_flags: <defaults>
</compile_context>

<pallas_src>
import functools

import jax
import jax.numpy as jnp
from jax.experimental import pallas as pl
from jax.experimental.pallas import tpu as pltpu

_LANE = 128
_WIDTH_CANDIDATES = (4096, 2048, 1024, 512, 256, 128)  # lane-dense slab widths (desc)


def _vmem_capacity_bytes():
    """Physical VMEM per TensorCore; conservative fallback if the query fails."""
    try:
        cap = getattr(pltpu.get_tpu_info(), "vmem_capacity_bytes", None)
        if cap:
            return int(cap)
    except Exception:
        pass
    return 64 << 20  # v7x has the smallest VMEM (64 MiB) -> safe on every generation


_VMEM_CAP_BYTES = _vmem_capacity_bytes()
# Leave headroom under physical VMEM; cap at 96 MiB even on 128 MiB parts.
_VMEM_LIMIT_BYTES = min(max(_VMEM_CAP_BYTES - (16 << 20), 32 << 20),
                        96 << 20, _VMEM_CAP_BYTES)
# Per-buffer streaming tile; 4 live buffers (double-buffered in + out) must fit.
_TARGET_TILE_BYTES = min(8 << 20, _VMEM_LIMIT_BYTES // 4)
assert 4 * _TARGET_TILE_BYTES <= _VMEM_LIMIT_BYTES <= _VMEM_CAP_BYTES


def _sublane_multiple(dtype):
    # Packed-sublane alignment: f32 -> 8, bf16/f16 -> 16, int8/uint8/fp8 -> 32.
    return max(8, 32 // jnp.dtype(dtype).itemsize)


def _clip_kernel(x_ref, o_ref, *, pixel_min, pixel_max):
    # Pure VPU elementwise clamp on the current VMEM tile, in the tensor dtype.
    x = x_ref[...]
    lo = jnp.asarray(pixel_min, dtype=x.dtype)
    hi = jnp.asarray(pixel_max, dtype=x.dtype)
    o_ref[...] = jnp.minimum(jnp.maximum(x, lo), hi)


def _clip_2d(x2d, pixel_min, pixel_max, block_shape, grid):
    kernel = functools.partial(_clip_kernel,
                               pixel_min=pixel_min, pixel_max=pixel_max)
    return pl.pallas_call(
        kernel,
        out_shape=jax.ShapeDtypeStruct(x2d.shape, x2d.dtype),
        grid=grid,
        in_specs=[pl.BlockSpec(block_shape, lambda i: (i, 0))],
        out_specs=pl.BlockSpec(block_shape, lambda i: (i, 0)),
        compiler_params=pltpu.CompilerParams(
            dimension_semantics=("parallel",),
            vmem_limit_bytes=_VMEM_LIMIT_BYTES,
        ),
    )(x2d)


def _clip_flat_aligned(flat, pixel_min, pixel_max):
    """Clamp a 1D array whose element count is a multiple of 128 (no padding)."""
    n = flat.size
    dtype = flat.dtype
    itemsize = jnp.dtype(dtype).itemsize
    sub = _sublane_multiple(dtype)

    # Prefer the largest lane-dense width that still gives a full packed-sublane
    # group of rows; otherwise fall back to 128 (tiny arrays only).
    divisors = [w for w in _WIDTH_CANDIDATES if n % w == 0]
    dense = [w for w in divisors if (n // w) >= sub]
    width = dense[0] if dense else divisors[-1]
    rows = n // width

    if rows <= sub:
        # Tiny array (<= ~128 KiB): one full-extent VMEM block.
        block_rows, grid = rows, (1,)
    else:
        target_rows = max(sub, _TARGET_TILE_BYTES // (width * itemsize))
        if n * itemsize > (1 << 20):
            # >= 2 grid steps so "parallel" can shard across v7x's two TensorCores.
            target_rows = min(target_rows, pl.cdiv(rows, 2))
        block_rows = max(sub, (min(rows, target_rows) // sub) * sub)
        # Rebalance to near-equal blocks -> smaller/denser ragged tail (v5e vst slot).
        num_blocks = pl.cdiv(rows, block_rows)
        block_rows = max(sub, ((pl.cdiv(rows, num_blocks) + sub - 1) // sub) * sub)
        grid = (pl.cdiv(rows, block_rows),)

    out2d = _clip_2d(flat.reshape(rows, width), pixel_min, pixel_max,
                     (block_rows, width), grid)
    return out2d.reshape(-1)


def _clip_flat_padded(flat, pixel_min, pixel_max):
    """Clamp a ragged 1D array: pad by < 128 elems into a dense slab, slice back."""
    n = flat.size
    pad = (-n) % _LANE
    out = _clip_flat_aligned(jnp.pad(flat, (0, pad)), pixel_min, pixel_max)
    return out[:n]


def clip_pallas(x, pixel_min, pixel_max):
    """torch.clamp(x, min=pixel_min, max=pixel_max) as a Pallas TPU kernel."""
    orig_shape = x.shape
    n = x.size
    if n == 0:
        return x
    flat = x.reshape(-1)
    itemsize = jnp.dtype(x.dtype).itemsize

    if n % _LANE == 0:
        out = _clip_flat_aligned(flat, pixel_min, pixel_max)
    elif n * itemsize <= _TARGET_TILE_BYTES:
        # Small ragged array: <=127-element pad into a dense (rows, width) slab.
        out = _clip_flat_padded(flat, pixel_min, pixel_max)
    else:
        # Rare large ragged array: stream the 128-aligned prefix through the
        # main kernel, clamp only the < 128-element tail, then stitch
        # (avoids the old whole-array pad + slice-back round trip).
        n_body = (n // _LANE) * _LANE
        body = _clip_flat_aligned(jax.lax.slice(flat, (0,), (n_body,)),
                                  pixel_min, pixel_max)
        tail = _clip_flat_padded(jax.lax.slice(flat, (n_body,), (n,)),
                                 pixel_min, pixel_max)
        out = jnp.concatenate([body, tail])

    return out.reshape(orig_shape)


class Clip:
    """Pallas analogue of the PyTorch Clip module (forward = clamp)."""

    def __init__(self, pixel_min, pixel_max):
        self.pixel_min = pixel_min
        self.pixel_max = pixel_max

    def __call__(self, x):
        return clip_pallas(x, self.pixel_min, self.pixel_max)

    def __repr__(self):
        return f"Clip(min={self.pixel_min}, max={self.pixel_max})"


if __name__ == "__main__":
    key = jax.random.PRNGKey(0)
    clip = Clip(-1.0, 1.0)

    # NCHW input consistent with the module: 2*4*16*16 = 2048 f32 elems
    # -> one dense (8, 256) block, grid=(1,).
    x = jax.random.normal(key, (2, 4, 16, 16), dtype=jnp.float32) * 2.0
    y = jax.block_until_ready(clip(x))
    assert y.shape == x.shape and y.dtype == x.dtype
    assert jnp.allclose(y, jnp.clip(x, -1.0, 1.0)), "mismatch (aligned f32 path)"

    # Ragged element count (2*3*17*19 = 1938, not a multiple of 128):
    # exercises the dense padded small path.
    x2 = jax.random.normal(jax.random.PRNGKey(1), (2, 3, 17, 19),
                           dtype=jnp.float32) * 2.0
    y2 = jax.block_until_ready(clip(x2))
    assert jnp.allclose(y2, jnp.clip(x2, -1.0, 1.0)), "mismatch (ragged path)"

    # bf16 pixels: sublane packing factor 16 -> dense (16, 1024) block.
    x3 = (jax.random.normal(jax.random.PRNGKey(2), (2, 8, 32, 32),
                            dtype=jnp.float32) * 2.0).astype(jnp.bfloat16)
    y3 = jax.block_until_ready(clip(x3))
    assert y3.dtype == jnp.bfloat16
    assert jnp.allclose(y3.astype(jnp.float32),
                        jnp.clip(x3.astype(jnp.float32), -1.0, 1.0)), \
        "mismatch (bf16 path)"

    print("KERNEL_OK")
</pallas_src>

<mosaic_0001>
module attributes {stable_mosaic.version = 11 : i64} {
  func.func @_clip_kernel(%arg0: i32, %arg1: memref<8x256xf32, #tpu.memory_space<vmem>>, %arg2: memref<8x256xf32, #tpu.memory_space<vmem>>) attributes {dimension_semantics = [#tpu.dimension_semantics<parallel>], iteration_bounds = array<i64: 1>, scalar_prefetch = 0 : i64, scratch_operands = 0 : i64, tpu.core_type = #tpu.core_type<tc>, window_params = [{transform_indices = @transform_0, window_bounds = array<i64: 8, 256>}, {transform_indices = @transform_1, window_bounds = array<i64: 8, 256>}]} {
    %c0 = arith.constant 0 : index
    %c0_0 = arith.constant 0 : index
    %0 = vector.load %arg1[%c0, %c0_0] : memref<8x256xf32, #tpu.memory_space<vmem>>, vector<8x256xf32>
    %cst = arith.constant -1.000000e+00 : f32
    %1 = vector.broadcast %cst : f32 to vector<8x256xf32>
    %2 = arith.maximumf %0, %1 : vector<8x256xf32>
    %cst_1 = arith.constant 1.000000e+00 : f32
    %3 = vector.broadcast %cst_1 : f32 to vector<8x256xf32>
    %4 = arith.minimumf %2, %3 : vector<8x256xf32>
    %c0_2 = arith.constant 0 : index
    %c0_3 = arith.constant 0 : index
    %5 = vector.load %arg2[%c0_2, %c0_3] : memref<8x256xf32, #tpu.memory_space<vmem>>, vector<8x256xf32>
    tpu.vector_store %arg2[%c0_2, %c0_3], %4 {strides = array<i32>} : memref<8x256xf32, #tpu.memory_space<vmem>>, vector<8x256xf32>,
    return
  }
  func.func @transform_0(%arg0: i32) -> (i32, i32) {
    %c0_i32 = arith.constant 0 : i32
    %c0_i32_0 = arith.constant 0 : i32
    return %arg0, %c0_i32 : i32, i32
  }
  func.func @transform_1(%arg0: i32) -> (i32, i32) {
    %c0_i32 = arith.constant 0 : i32
    %c0_i32_0 = arith.constant 0 : i32
    return %arg0, %c0_i32 : i32, i32
  }
}

</mosaic_0001>

<llo_original>
// kernel: tpu_custom_call.1
$region0: #{tpu_custom_call.1}
  #allocation0 [shape = 'u32[]', space=smem, size = 0x4, offset = 0x4, fixed_abs, tag = 'smem constant byte address 0x4 - core index']
  #allocation1 [shape = 'u32[72,128]{1,0:T(1,128)}', space=vmem, size = 0x9000, scoped, tag = 'internal scratch']
  %s0 = inlined_call_operand.hbm [shape: f32[8,256], index: 0, kind: input, shape index: {}]
  %s1 = inlined_call_operand.hbm [shape: f32[8,256], index: 1, kind: output, shape index: {}]
  %s2 = sld [smem:[#allocation0]]
  $region18: #{tpu_custom_call.1} parent=0
    _
  %s4 = ssub.s32 1, %s2
  %s5 = scalar_select 0, %s4, %s2
  $region1: #{tpu_custom_call.1} parent=0
    #allocation2 [shape = 'u8[8192]{0}', space=vmem, size = 0x2000, scoped, tag = 'input window, operand 0, single buffered']
    #allocation3 [shape = 's32[1]{0}', space=sflag, size = 0x4, scoped, tag = 'scoped memory for tpu_custom_call.1']
    #allocation4 [shape = 's32[1]{0}', space=sflag, size = 0x4, scoped, tag = 'scoped memory for tpu_custom_call.1']
    #allocation5 [shape = 'u8[8192]{0}', space=vmem, size = 0x2000, scoped, tag = 'output window, operand 0, single buffered']
    %6 = vsyncpa [#allocation3], 0
    %7 = vsyncpa [#allocation4], 0
    // Predicated region
    $region2: #{tpu_custom_call.1} parent=1 // pred_check
      _
    $region3: #{tpu_custom_call.1} parent=1 // pred_check_branch
      %9 = sbr.rel (0) target = $region5
    $region4: #{tpu_custom_call.1} parent=1 // pred_region
      %11 = vsyncadd [#allocation3], 0
      %s13 = sshll.u32 %s0, 4
      %s14 = int_to_ptr.hbm [resolvable:$true] %s13
      %s15 = sshll.u32 [#allocation2], 4
      %s16 = int_to_ptr.vmem [resolvable:$true] %s15
      %18 = dma.hbm_to_vmem [thread:$0]  %s14, 256, %s16, [#allocation3]
    $region5: #{tpu_custom_call.1} parent=1 // pred_fallthru
      _
    // Predicated region
    $region6: #{tpu_custom_call.1} parent=1 // pred_check
      _
    $region7: #{tpu_custom_call.1} parent=1 // pred_check_branch
      %20 = sbr.rel (0) target = $region9
    $region8: #{tpu_custom_call.1} parent=1 // pred_region
      %22 = dma.done [#allocation3], 256
    $region9: #{tpu_custom_call.1} parent=1 // pred_fallthru
      _
    %v23 = vld [vmem:[#allocation2] sm:$0xff]
    %v24 = vld [vmem:[#allocation2 + $0x8] sm:$0xff]
    %v25 = vmax.f32 %v23, -1.0
    %v26 = vmax.f32 %v24, -1.0
    %v27 = vmin.f32 %v25, 1.0
    %v28 = vmin.f32 %v26, 1.0
    %29 = vst [vmem:[#allocation5] sm:$0xff] %v27
    %30 = vst [vmem:[#allocation5 + $0x8] sm:$0xff] %v28
    // Predicated region
    $region10: #{tpu_custom_call.1} parent=1 // pred_check
      _
    $region11: #{tpu_custom_call.1} parent=1 // pred_check_branch
      %32 = sbr.rel (0) target = $region13
    $region12: #{tpu_custom_call.1} parent=1 // pred_region
      %34 = vsyncadd [#allocation4], 0
      %s36 = sshll.u32 [#allocation5], 4
      %s37 = int_to_ptr.vmem [resolvable:$true] %s36
      %s38 = sshll.u32 %s1, 4
      %s39 = int_to_ptr.hbm [resolvable:$true] %s38
      %41 = dma.vmem_to_hbm [thread:$0]  %s37, 256, %s39, [#allocation4]
    $region13: #{tpu_custom_call.1} parent=1 // pred_fallthru
      _
    // Predicated region
    $region14: #{tpu_custom_call.1} parent=1 // pred_check
      _
    $region15: #{tpu_custom_call.1} parent=1 // pred_check_branch
      %43 = sbr.rel (0) target = $region17
    $region16: #{tpu_custom_call.1} parent=1 // pred_region
      %45 = dma.done [#allocation4], 256
    $region17: #{tpu_custom_call.1} parent=1 // pred_fallthru
      _
    %46 = vsyncpa [#allocation3], 1
    %47 = vsyncpa [#allocation4], 1

</llo_original>
